<compile_context>
chip_gen: v7x
topology: tpu7x:2x2x1
jax: 0.10.0
libtpu: 0.0.40
codegen_flags: <defaults>
</compile_context>

<pallas_src>
import jax
import jax.numpy as jnp
from jax.experimental import pallas as pl
from jax.experimental.pallas import tpu as pltpu

INPUT_SIZE = 32      # stands in for X_train_imputed.shape[1]
ENCODING_SIZE = 64
BATCH = 16
PAD = 128            # lane width; every feature/hidden dim is padded to this
NUM_LAYERS = 6
NO_RELU = (2, 5)     # last encoder layer / last decoder layer have no ReLU
MAX_TILE_B = 512     # batch tile for large batches (amortizes per-step cost)


def autoencoder_kernel(x_ref, w_ref, b_ref, out_ref):
    """x_ref:[TILE_B,128], w_ref:[6,128,128], b_ref:[6,1,128], out_ref:[TILE_B,128]."""
    h = x_ref[...]
    for layer in range(NUM_LAYERS):          # static unroll, 6 MXU matmuls
        h = jnp.dot(h, w_ref[layer], preferred_element_type=jnp.float32) + b_ref[layer]
        if layer not in NO_RELU:
            h = jnp.maximum(h, 0.0)
    out_ref[...] = h.astype(out_ref.dtype)


def pack_params(params, pad=PAD):
    """Pack 6 (Wt=[in,out], b=[1,out]) layers into W:[6,pad,pad], b:[6,1,pad].

    Zero padding is exact (padded rows/cols/biases are 0).  Call ONCE at
    parameter-init time; the packed arrays are reused by every forward call.
    """
    w_packed = jnp.zeros((NUM_LAYERS, pad, pad), jnp.float32)
    b_packed = jnp.zeros((NUM_LAYERS, 1, pad), jnp.float32)
    for layer, (wt, b) in enumerate(params):
        fi, fo = wt.shape
        w_packed = w_packed.at[layer, :fi, :fo].set(wt)
        b_packed = b_packed.at[layer, :, :fo].set(b)
    return w_packed, b_packed


def _round_up(n, m):
    return ((n + m - 1) // m) * m


@jax.jit
def autoencoder_forward(x, w_packed, b_packed):
    """x: [B, F] float32.  w_packed: [6,128,128], b_packed: [6,1,128] (pre-padded)."""
    B, F = x.shape
    # Batch tile: single block for tiny batches, 512-row tiles for large ones.
    tile_b = MAX_TILE_B if B >= MAX_TILE_B else _round_up(max(B, 8), 8)
    b_pad = _round_up(B, tile_b)
    grid = (b_pad // tile_b,)

    # Pad batch to the tile multiple and features to 128 lanes (exact: zeros).
    x_p = jnp.zeros((b_pad, PAD), x.dtype).at[:B, :F].set(x)

    out_p = pl.pallas_call(
        autoencoder_kernel,
        grid=grid,
        in_specs=[
            # x: streamed batch tiles.
            pl.BlockSpec((tile_b, PAD), lambda i: (i, 0)),
            # packed weights / biases: constant index_map -> VMEM-resident,
            # not re-DMA'd per grid step.
            pl.BlockSpec((NUM_LAYERS, PAD, PAD), lambda i: (0, 0, 0)),
            pl.BlockSpec((NUM_LAYERS, 1, PAD), lambda i: (0, 0, 0)),
        ],
        out_specs=pl.BlockSpec((tile_b, PAD), lambda i: (i, 0)),
        out_shape=jax.ShapeDtypeStruct((b_pad, PAD), x.dtype),
        compiler_params=pltpu.CompilerParams(
            dimension_semantics=("parallel",)),   # v7x: shard batch over 2 TCs
    )(x_p, w_packed, b_packed)
    return out_p[:B, :F]


def init_linear(key, fan_in, fan_out):
    """PyTorch-style uniform(-1/sqrt(fan_in), 1/sqrt(fan_in)); returns (Wt, b)."""
    kw, kb = jax.random.split(key)
    bound = 1.0 / jnp.sqrt(fan_in)
    wt = jax.random.uniform(kw, (fan_in, fan_out), jnp.float32, -bound, bound)
    b = jax.random.uniform(kb, (1, fan_out), jnp.float32, -bound, bound)
    return wt, b


def reference_forward(x, params):
    h = x
    for idx, (wt, b) in enumerate(params):
        h = h @ wt + b
        if idx not in NO_RELU:
            h = jnp.maximum(h, 0.0)
    return h


if __name__ == "__main__":
    key = jax.random.PRNGKey(0)
    keys = jax.random.split(key, 7)

    layer_dims = [(INPUT_SIZE, 64), (64, 32), (32, ENCODING_SIZE),    # encoder
                  (ENCODING_SIZE, 32), (32, 64), (64, INPUT_SIZE)]    # decoder
    params = [init_linear(k, fi, fo) for k, (fi, fo) in zip(keys[:6], layer_dims)]

    # Pre-pad + pack parameters ONCE (hoisted out of the forward path).
    w_packed, b_packed = pack_params(params)

    x = jax.random.normal(keys[6], (BATCH, INPUT_SIZE), jnp.float32)

    # TODO(synk): sklearn SimpleImputer preprocessing / Adam training loop from
    # the original script are outside the nn.Module forward and not implemented.
    out = autoencoder_forward(x, w_packed, b_packed)
    out = jax.block_until_ready(out)

    ref = reference_forward(x, params)
    assert out.shape == (BATCH, INPUT_SIZE)
    assert jnp.allclose(out, ref, atol=1e-4, rtol=1e-4)

    print("KERNEL_OK")
</pallas_src>

<mosaic_0001>
module attributes {stable_mosaic.version = 11 : i64} {
  func.func @autoencoder_kernel(%arg0: i32, %arg1: memref<16x128xf32, #tpu.memory_space<vmem>>, %arg2: memref<6x128x128xf32, #tpu.memory_space<vmem>>, %arg3: memref<6x1x128xf32, #tpu.memory_space<vmem>>, %arg4: memref<16x128xf32, #tpu.memory_space<vmem>>) attributes {dimension_semantics = [#tpu.dimension_semantics<parallel>], iteration_bounds = array<i64: 1>, scalar_prefetch = 0 : i64, scratch_operands = 0 : i64, tpu.core_type = #tpu.core_type<tc>, window_params = [{transform_indices = @transform_0, window_bounds = array<i64: 16, 128>}, {pipeline_mode = #tpu.pipeline_mode<synchronous>, transform_indices = @transform_1, window_bounds = array<i64: 6, 128, 128>}, {pipeline_mode = #tpu.pipeline_mode<synchronous>, transform_indices = @transform_2, window_bounds = array<i64: 6, 1, 128>}, {transform_indices = @transform_3, window_bounds = array<i64: 16, 128>}]} {
    %c0 = arith.constant 0 : index
    %c0_0 = arith.constant 0 : index
    %0 = vector.load %arg1[%c0, %c0_0] : memref<16x128xf32, #tpu.memory_space<vmem>>, vector<16x128xf32>
    %c0_1 = arith.constant 0 : index
    %c0_2 = arith.constant 0 : index
    %c0_3 = arith.constant 0 : index
    %1 = vector.load %arg2[%c0_1, %c0_2, %c0_3] : memref<6x128x128xf32, #tpu.memory_space<vmem>>, vector<1x128x128xf32>
    %2 = vector.shape_cast %1 : vector<1x128x128xf32> to vector<128x128xf32>
    %cst = arith.constant dense<0.000000e+00> : vector<16x128xf32>
    %3 = tpu.matmul %0, %2, %cst {dimension_numbers = #tpu.dot_dimension_numbers<[1], [0], [0], [1], [0, 0, 1, 1], [], []>} : vector<16x128xf32>, vector<128x128xf32>, vector<16x128xf32> -> vector<16x128xf32>
    %c0_4 = arith.constant 0 : index
    %c0_5 = arith.constant 0 : index
    %c0_6 = arith.constant 0 : index
    %4 = vector.load %arg3[%c0_4, %c0_5, %c0_6] : memref<6x1x128xf32, #tpu.memory_space<vmem>>, vector<1x1x128xf32>
    %5 = vector.shape_cast %4 : vector<1x1x128xf32> to vector<1x128xf32>
    %6 = vector.broadcast %5 : vector<1x128xf32> to vector<16x128xf32>
    %7 = arith.addf %3, %6 : vector<16x128xf32>
    %cst_7 = arith.constant 0.000000e+00 : f32
    %8 = vector.broadcast %cst_7 : f32 to vector<16x128xf32>
    %9 = arith.maximumf %7, %8 : vector<16x128xf32>
    %c1 = arith.constant 1 : index
    %c0_8 = arith.constant 0 : index
    %c0_9 = arith.constant 0 : index
    %10 = vector.load %arg2[%c1, %c0_8, %c0_9] : memref<6x128x128xf32, #tpu.memory_space<vmem>>, vector<1x128x128xf32>
    %11 = vector.shape_cast %10 : vector<1x128x128xf32> to vector<128x128xf32>
    %cst_10 = arith.constant dense<0.000000e+00> : vector<16x128xf32>
    %12 = tpu.matmul %9, %11, %cst_10 {dimension_numbers = #tpu.dot_dimension_numbers<[1], [0], [0], [1], [0, 0, 1, 1], [], []>} : vector<16x128xf32>, vector<128x128xf32>, vector<16x128xf32> -> vector<16x128xf32>
    %c1_11 = arith.constant 1 : index
    %c0_12 = arith.constant 0 : index
    %c0_13 = arith.constant 0 : index
    %13 = vector.load %arg3[%c1_11, %c0_12, %c0_13] : memref<6x1x128xf32, #tpu.memory_space<vmem>>, vector<1x1x128xf32>
    %14 = vector.shape_cast %13 : vector<1x1x128xf32> to vector<1x128xf32>
    %15 = vector.broadcast %14 : vector<1x128xf32> to vector<16x128xf32>
    %16 = arith.addf %12, %15 : vector<16x128xf32>
    %cst_14 = arith.constant 0.000000e+00 : f32
    %17 = vector.broadcast %cst_14 : f32 to vector<16x128xf32>
    %18 = arith.maximumf %16, %17 : vector<16x128xf32>
    %c2 = arith.constant 2 : index
    %c0_15 = arith.constant 0 : index
    %c0_16 = arith.constant 0 : index
    %19 = vector.load %arg2[%c2, %c0_15, %c0_16] : memref<6x128x128xf32, #tpu.memory_space<vmem>>, vector<1x128x128xf32>
    %20 = vector.shape_cast %19 : vector<1x128x128xf32> to vector<128x128xf32>
    %cst_17 = arith.constant dense<0.000000e+00> : vector<16x128xf32>
    %21 = tpu.matmul %18, %20, %cst_17 {dimension_numbers = #tpu.dot_dimension_numbers<[1], [0], [0], [1], [0, 0, 1, 1], [], []>} : vector<16x128xf32>, vector<128x128xf32>, vector<16x128xf32> -> vector<16x128xf32>
    %c2_18 = arith.constant 2 : index
    %c0_19 = arith.constant 0 : index
    %c0_20 = arith.constant 0 : index
    %22 = vector.load %arg3[%c2_18, %c0_19, %c0_20] : memref<6x1x128xf32, #tpu.memory_space<vmem>>, vector<1x1x128xf32>
    %23 = vector.shape_cast %22 : vector<1x1x128xf32> to vector<1x128xf32>
    %24 = vector.broadcast %23 : vector<1x128xf32> to vector<16x128xf32>
    %25 = arith.addf %21, %24 : vector<16x128xf32>
    %c3 = arith.constant 3 : index
    %c0_21 = arith.constant 0 : index
    %c0_22 = arith.constant 0 : index
    %26 = vector.load %arg2[%c3, %c0_21, %c0_22] : memref<6x128x128xf32, #tpu.memory_space<vmem>>, vector<1x128x128xf32>
    %27 = vector.shape_cast %26 : vector<1x128x128xf32> to vector<128x128xf32>
    %cst_23 = arith.constant dense<0.000000e+00> : vector<16x128xf32>
    %28 = tpu.matmul %25, %27, %cst_23 {dimension_numbers = #tpu.dot_dimension_numbers<[1], [0], [0], [1], [0, 0, 1, 1], [], []>} : vector<16x128xf32>, vector<128x128xf32>, vector<16x128xf32> -> vector<16x128xf32>
    %c3_24 = arith.constant 3 : index
    %c0_25 = arith.constant 0 : index
    %c0_26 = arith.constant 0 : index
    %29 = vector.load %arg3[%c3_24, %c0_25, %c0_26] : memref<6x1x128xf32, #tpu.memory_space<vmem>>, vector<1x1x128xf32>
    %30 = vector.shape_cast %29 : vector<1x1x128xf32> to vector<1x128xf32>
    %31 = vector.broadcast %30 : vector<1x128xf32> to vector<16x128xf32>
    %32 = arith.addf %28, %31 : vector<16x128xf32>
    %cst_27 = arith.constant 0.000000e+00 : f32
    %33 = vector.broadcast %cst_27 : f32 to vector<16x128xf32>
    %34 = arith.maximumf %32, %33 : vector<16x128xf32>
    %c4 = arith.constant 4 : index
    %c0_28 = arith.constant 0 : index
    %c0_29 = arith.constant 0 : index
    %35 = vector.load %arg2[%c4, %c0_28, %c0_29] : memref<6x128x128xf32, #tpu.memory_space<vmem>>, vector<1x128x128xf32>
    %36 = vector.shape_cast %35 : vector<1x128x128xf32> to vector<128x128xf32>
    %cst_30 = arith.constant dense<0.000000e+00> : vector<16x128xf32>
    %37 = tpu.matmul %34, %36, %cst_30 {dimension_numbers = #tpu.dot_dimension_numbers<[1], [0], [0], [1], [0, 0, 1, 1], [], []>} : vector<16x128xf32>, vector<128x128xf32>, vector<16x128xf32> -> vector<16x128xf32>
    %c4_31 = arith.constant 4 : index
    %c0_32 = arith.constant 0 : index
    %c0_33 = arith.constant 0 : index
    %38 = vector.load %arg3[%c4_31, %c0_32, %c0_33] : memref<6x1x128xf32, #tpu.memory_space<vmem>>, vector<1x1x128xf32>
    %39 = vector.shape_cast %38 : vector<1x1x128xf32> to vector<1x128xf32>
    %40 = vector.broadcast %39 : vector<1x128xf32> to vector<16x128xf32>
    %41 = arith.addf %37, %40 : vector<16x128xf32>
    %cst_34 = arith.constant 0.000000e+00 : f32
    %42 = vector.broadcast %cst_34 : f32 to vector<16x128xf32>
    %43 = arith.maximumf %41, %42 : vector<16x128xf32>
    %c5 = arith.constant 5 : index
    %c0_35 = arith.constant 0 : index
    %c0_36 = arith.constant 0 : index
    %44 = vector.load %arg2[%c5, %c0_35, %c0_36] : memref<6x128x128xf32, #tpu.memory_space<vmem>>, vector<1x128x128xf32>
    %45 = vector.shape_cast %44 : vector<1x128x128xf32> to vector<128x128xf32>
    %cst_37 = arith.constant dense<0.000000e+00> : vector<16x128xf32>
    %46 = tpu.matmul %43, %45, %cst_37 {dimension_numbers = #tpu.dot_dimension_numbers<[1], [0], [0], [1], [0, 0, 1, 1], [], []>} : vector<16x128xf32>, vector<128x128xf32>, vector<16x128xf32> -> vector<16x128xf32>
    %c5_38 = arith.constant 5 : index
    %c0_39 = arith.constant 0 : index
    %c0_40 = arith.constant 0 : index
    %47 = vector.load %arg3[%c5_38, %c0_39, %c0_40] : memref<6x1x128xf32, #tpu.memory_space<vmem>>, vector<1x1x128xf32>
    %48 = vector.shape_cast %47 : vector<1x1x128xf32> to vector<1x128xf32>
    %49 = vector.broadcast %48 : vector<1x128xf32> to vector<16x128xf32>
    %50 = arith.addf %46, %49 : vector<16x128xf32>
    %c0_41 = arith.constant 0 : index
    %c0_42 = arith.constant 0 : index
    %51 = vector.load %arg4[%c0_41, %c0_42] : memref<16x128xf32, #tpu.memory_space<vmem>>, vector<16x128xf32>
    tpu.vector_store %arg4[%c0_41, %c0_42], %50 {strides = array<i32>} : memref<16x128xf32, #tpu.memory_space<vmem>>, vector<16x128xf32>,
    return
  }
  func.func @transform_0(%arg0: i32) -> (i32, i32) {
    %c0_i32 = arith.constant 0 : i32
    %c0_i32_0 = arith.constant 0 : i32
    return %arg0, %c0_i32 : i32, i32
  }
  func.func @transform_1(%arg0: i32) -> (i32, i32, i32) {
    %c0_i32 = arith.constant 0 : i32
    %c0_i32_0 = arith.constant 0 : i32
    %c0_i32_1 = arith.constant 0 : i32
    %c0_i32_2 = arith.constant 0 : i32
    return %c0_i32, %c0_i32_0, %c0_i32_1 : i32, i32, i32
  }
  func.func @transform_2(%arg0: i32) -> (i32, i32, i32) {
    %c0_i32 = arith.constant 0 : i32
    %c0_i32_0 = arith.constant 0 : i32
    %c0_i32_1 = arith.constant 0 : i32
    %c0_i32_2 = arith.constant 0 : i32
    return %c0_i32, %c0_i32_0, %c0_i32_1 : i32, i32, i32
  }
  func.func @transform_3(%arg0: i32) -> (i32, i32) {
    %c0_i32 = arith.constant 0 : i32
    %c0_i32_0 = arith.constant 0 : i32
    return %arg0, %c0_i32 : i32, i32
  }
}

</mosaic_0001>

<llo_original>
// kernel: autoencoder_forward.1
$region0: #{autoencoder_forward.1}
  #allocation0 [shape = 'u32[]', space=smem, size = 0x4, offset = 0x4, fixed_abs, tag = 'smem constant byte address 0x4 - core index']
  #allocation1 [shape = 'u32[144,128]{1,0:T(1,128)}', space=vmem, size = 0x12000, scoped, tag = 'internal scratch']
  %s0 = inlined_call_operand.vmem [shape: f32[16,128], index: 0, kind: input, shape index: {}]
  %s1 = inlined_call_operand.hbm [shape: f32[6,128,128], index: 1, kind: input, shape index: {}]
  %s2 = inlined_call_operand.vmem [shape: f32[6,1,128], index: 2, kind: input, shape index: {}]
  %s3 = inlined_call_operand.hbm [shape: f32[16,128], index: 3, kind: output, shape index: {}]
  %s4 = sld [smem:[#allocation0]]
  $region26: #{autoencoder_forward.1} parent=0
    _
  %s6 = ssub.s32 1, %s4
  %s7 = scalar_select 0, %s6, %s4
  $region1: #{autoencoder_forward.1} parent=0
    #allocation2 [shape = 'u8[393216]{0}', space=vmem, size = 0x60000, scoped, tag = 'input window, operand 1, single buffered']
    #allocation3 [shape = 's32[1]{0}', space=sflag, size = 0x4, scoped, tag = 'scoped memory for autoencoder_forward.1']
    #allocation4 [shape = 's32[1]{0}', space=sflag, size = 0x4, scoped, tag = 'scoped memory for autoencoder_forward.1']
    #allocation5 [shape = 'u8[8192]{0}', space=vmem, size = 0x2000, scoped, tag = 'output window, operand 0, single buffered']
    %8 = vsyncpa [#allocation3], 0
    %9 = vsyncpa [#allocation4], 0
    // Predicated region
    $region2: #{autoencoder_forward.1} parent=1 // pred_check
      _
    $region3: #{autoencoder_forward.1} parent=1 // pred_check_branch
      %11 = sbr.rel (0) target = $region5
    $region4: #{autoencoder_forward.1} parent=1 // pred_region
      _
    $region5: #{autoencoder_forward.1} parent=1 // pred_fallthru
      _
    // Predicated region
    $region6: #{autoencoder_forward.1} parent=1 // pred_check
      _
    $region7: #{autoencoder_forward.1} parent=1 // pred_check_branch
      %13 = sbr.rel (0) target = $region9
    $region8: #{autoencoder_forward.1} parent=1 // pred_region
      %s15 = ssub.s32 12288, 12288
      %16 = vsyncadd [#allocation3], %s15
      %s17 = sshll.u32 [#allocation2], 4
      %s18 = int_to_ptr.vmem [resolvable:$true] %s17
      %23 = dma.hbm_to_vmem [thread:$0]  %s1, 12288, %s18, [#allocation3], 128, 128, 8
    $region9: #{autoencoder_forward.1} parent=1 // pred_fallthru
      _
    // Predicated region
    $region10: #{autoencoder_forward.1} parent=1 // pred_check
      _
    $region11: #{autoencoder_forward.1} parent=1 // pred_check_branch
      %25 = sbr.rel (0) target = $region13
    $region12: #{autoencoder_forward.1} parent=1 // pred_region
      _
    $region13: #{autoencoder_forward.1} parent=1 // pred_fallthru
      _
    // Predicated region
    $region14: #{autoencoder_forward.1} parent=1 // pred_check
      _
    $region15: #{autoencoder_forward.1} parent=1 // pred_check_branch
      %27 = sbr.rel (0) target = $region17
    $region16: #{autoencoder_forward.1} parent=1 // pred_region
      %28 = dma.done [#allocation3], 12288
    $region17: #{autoencoder_forward.1} parent=1 // pred_fallthru
      _
    %v29 = vld [vmem:[%s0] sm:$0xff]
    %v30 = vld [vmem:[%s0 + $0x8] sm:$0xff]
    %v31 = vld [vmem:[#allocation2] sm:$0xff]
    %v32 = vld [vmem:[#allocation2 + $0x8] sm:$0xff]
    %v33 = vld [vmem:[#allocation2 + $0x10] sm:$0xff]
    %v34 = vld [vmem:[#allocation2 + $0x18] sm:$0xff]
    %v35 = vld [vmem:[#allocation2 + $0x20] sm:$0xff]
    %v36 = vld [vmem:[#allocation2 + $0x28] sm:$0xff]
    %v37 = vld [vmem:[#allocation2 + $0x30] sm:$0xff]
    %v38 = vld [vmem:[#allocation2 + $0x38] sm:$0xff]
    %v39 = vld [vmem:[#allocation2 + $0x40] sm:$0xff]
    %v40 = vld [vmem:[#allocation2 + $0x48] sm:$0xff]
    %v41 = vld [vmem:[#allocation2 + $0x50] sm:$0xff]
    %v42 = vld [vmem:[#allocation2 + $0x58] sm:$0xff]
    %v43 = vld [vmem:[#allocation2 + $0x60] sm:$0xff]
    %v44 = vld [vmem:[#allocation2 + $0x68] sm:$0xff]
    %v45 = vld [vmem:[#allocation2 + $0x70] sm:$0xff]
    %v46 = vld [vmem:[#allocation2 + $0x78] sm:$0xff]
    %v47 = vld [vmem:[%s2] sm:$0x1]
    %v49 = vlaneseq
    %v50 = vshrl.u32 %v49, 7
    %v51 = vsub.s32 0, %v50
    %v52 = vrot.slane %v47, %v51
    %54 = vmatprep.subr.mxu0 0.0
    %55 = vmatpush1.msra.mxu0 %v31
    %56 = vmatprep.subr.mxu0 0.0
    %57 = vmatpush1.msra.mxu0 %v32
    %58 = vmatprep.subr.mxu0 0.0
    %59 = vmatpush1.msra.mxu0 %v33
    %60 = vmatprep.subr.mxu0 0.0
    %61 = vmatpush1.msra.mxu0 %v34
    %62 = vmatprep.subr.mxu0 0.0
    %63 = vmatpush1.msra.mxu0 %v35
    %64 = vmatprep.subr.mxu0 0.0
    %65 = vmatpush1.msra.mxu0 %v36
    %66 = vmatprep.subr.mxu0 0.0
    %67 = vmatpush1.msra.mxu0 %v37
    %68 = vmatprep.subr.mxu0 0.0
    %69 = vmatpush1.msra.mxu0 %v38
    %70 = vmatprep.subr.mxu0 0.0
    %71 = vmatpush1.msra.mxu0 %v39
    %72 = vmatprep.subr.mxu0 0.0
    %73 = vmatpush1.msra.mxu0 %v40
    %74 = vmatprep.subr.mxu0 0.0
    %75 = vmatpush1.msra.mxu0 %v41
    %76 = vmatprep.subr.mxu0 0.0
    %77 = vmatpush1.msra.mxu0 %v42
    %78 = vmatprep.subr.mxu0 0.0
    %79 = vmatpush1.msra.mxu0 %v43
    %80 = vmatprep.subr.mxu0 0.0
    %81 = vmatpush1.msra.mxu0 %v44
    %82 = vmatprep.subr.mxu0 0.0
    %83 = vmatpush1.msra.mxu0 %v45
    %84 = vmatprep.subr.mxu0 0.0
    %85 = vmatpush1.msra.mxu0 %v46
    %86 = vmatprep.subr.mxu0 0.0
    %87 = vmatpush1.msra.mxu0 0.0
    %88 = vmatprep.subr.mxu0 0.0
    %89 = vmatpush1.msra.mxu0 0.0
    %90 = vmatprep.subr.mxu0 0.0
    %91 = vmatpush1.msra.mxu0 0.0
    %92 = vmatprep.subr.mxu0 0.0
    %93 = vmatpush1.msra.mxu0 0.0
    %94 = vmatprep.subr.mxu0 0.0
    %95 = vmatpush1.msra.mxu0 0.0
    %96 = vmatprep.subr.mxu0 0.0
    %97 = vmatpush1.msra.mxu0 0.0
    %98 = vmatprep.subr.mxu0 0.0
    %99 = vmatpush1.msra.mxu0 0.0
    %100 = vmatprep.subr.mxu0 0.0
    %101 = vmatpush1.msra.mxu0 0.0
    %102 = vmatprep.subr.mxu0 0.0
    %103 = vmatpush1.msra.mxu0 0.0
    %104 = vmatprep.subr.mxu0 0.0
    %105 = vmatpush1.msra.mxu0 0.0
    %106 = vmatprep.subr.mxu0 0.0
    %107 = vmatpush1.msra.mxu0 0.0
    %108 = vmatprep.subr.mxu0 0.0
    %109 = vmatpush1.msra.mxu0 0.0
    %110 = vmatprep.subr.mxu0 0.0
    %111 = vmatpush1.msra.mxu0 0.0
    %112 = vmatprep.subr.mxu0 0.0
    %113 = vmatpush1.msra.mxu0 0.0
    %114 = vmatprep.subr.mxu0 0.0
    %115 = vmatpush1.msra.mxu0 0.0
    %116 = vmatprep.subr.mxu0 0.0
    %117 = vmatpush1.msra.mxu0 0.0
    %118 = vmatprep.mubr.f32.mxu0 0.0
    %119 = vmatmul.mubr.f32.gmra.mrb[0].mxu0 %v29
    %v120 = vpop.f32.mrb[0].mxu0
    %v121 = vadd.f32 %v52, %v120
    %v122 = vpop.f32.mrb[0].mxu0
    %123 = vmatprep.mubr.f32.mxu0 0.0
    %124 = vmatmul.mubr.f32.gmra.mrb[0].mxu0 %v30
    %v125 = vpop.f32.mrb[0].mxu0
    %v126 = vadd.f32 %v52, %v125
    %v127 = vpop.f32.mrb[0].mxu0
    %128 = vdwg.mxu0
    %v129 = vmax.f32 %v121, 0.0
    %v130 = vmax.f32 %v126, 0.0
    %s131 = scalar_lea.vmem [#allocation2], 128
    %v132 = vld [vmem:[%s131] sm:$0xff]
    %v133 = vld [vmem:[%s131 + $0x8] sm:$0xff]
    %v134 = vld [vmem:[%s131 + $0x10] sm:$0xff]
    %v135 = vld [vmem:[%s131 + $0x18] sm:$0xff]
    %v136 = vld [vmem:[%s131 + $0x20] sm:$0xff]
    %v137 = vld [vmem:[%s131 + $0x28] sm:$0xff]
    %v138 = vld [vmem:[%s131 + $0x30] sm:$0xff]
    %v139 = vld [vmem:[%s131 + $0x38] sm:$0xff]
    %v140 = vld [vmem:[%s131 + $0x40] sm:$0xff]
    %v141 = vld [vmem:[%s131 + $0x48] sm:$0xff]
    %v142 = vld [vmem:[%s131 + $0x50] sm:$0xff]
    %v143 = vld [vmem:[%s131 + $0x58] sm:$0xff]
    %v144 = vld [vmem:[%s131 + $0x60] sm:$0xff]
    %v145 = vld [vmem:[%s131 + $0x68] sm:$0xff]
    %v146 = vld [vmem:[%s131 + $0x70] sm:$0xff]
    %v147 = vld [vmem:[%s131 + $0x78] sm:$0xff]
    %s148 = scalar_lea.vmem %s2, 1
    %v149 = vld [vmem:[%s148] sm:$0x1]
    %v151 = vlaneseq
    %v152 = vshrl.u32 %v151, 7
    %v153 = vsub.s32 0, %v152
    %v154 = vrot.slane %v149, %v153
    %156 = vmatprep.subr.mxu0 0.0
    %157 = vmatpush1.msra.mxu0 %v132
    %158 = vmatprep.subr.mxu0 0.0
    %159 = vmatpush1.msra.mxu0 %v133
    %160 = vmatprep.subr.mxu0 0.0
    %161 = vmatpush1.msra.mxu0 %v134
    %162 = vmatprep.subr.mxu0 0.0
    %163 = vmatpush1.msra.mxu0 %v135
    %164 = vmatprep.subr.mxu0 0.0
    %165 = vmatpush1.msra.mxu0 %v136
    %166 = vmatprep.subr.mxu0 0.0
    %167 = vmatpush1.msra.mxu0 %v137
    %168 = vmatprep.subr.mxu0 0.0
    %169 = vmatpush1.msra.mxu0 %v138
    %170 = vmatprep.subr.mxu0 0.0
    %171 = vmatpush1.msra.mxu0 %v139
    %172 = vmatprep.subr.mxu0 0.0
    %173 = vmatpush1.msra.mxu0 %v140
    %174 = vmatprep.subr.mxu0 0.0
    %175 = vmatpush1.msra.mxu0 %v141
    %176 = vmatprep.subr.mxu0 0.0
    %177 = vmatpush1.msra.mxu0 %v142
    %178 = vmatprep.subr.mxu0 0.0
    %179 = vmatpush1.msra.mxu0 %v143
    %180 = vmatprep.subr.mxu0 0.0
    %181 = vmatpush1.msra.mxu0 %v144
    %182 = vmatprep.subr.mxu0 0.0
    %183 = vmatpush1.msra.mxu0 %v145
    %184 = vmatprep.subr.mxu0 0.0
    %185 = vmatpush1.msra.mxu0 %v146
    %186 = vmatprep.subr.mxu0 0.0
    %187 = vmatpush1.msra.mxu0 %v147
    %188 = vmatprep.subr.mxu0 0.0
    %189 = vmatpush1.msra.mxu0 0.0
    %190 = vmatprep.subr.mxu0 0.0
    %191 = vmatpush1.msra.mxu0 0.0
    %192 = vmatprep.subr.mxu0 0.0
    %193 = vmatpush1.msra.mxu0 0.0
    %194 = vmatprep.subr.mxu0 0.0
    %195 = vmatpush1.msra.mxu0 0.0
    %196 = vmatprep.subr.mxu0 0.0
    %197 = vmatpush1.msra.mxu0 0.0
    %198 = vmatprep.subr.mxu0 0.0
    %199 = vmatpush1.msra.mxu0 0.0
    %200 = vmatprep.subr.mxu0 0.0
    %201 = vmatpush1.msra.mxu0 0.0
    %202 = vmatprep.subr.mxu0 0.0
    %203 = vmatpush1.msra.mxu0 0.0
    %204 = vmatprep.subr.mxu0 0.0
    %205 = vmatpush1.msra.mxu0 0.0
    %206 = vmatprep.subr.mxu0 0.0
    %207 = vmatpush1.msra.mxu0 0.0
    %208 = vmatprep.subr.mxu0 0.0
    %209 = vmatpush1.msra.mxu0 0.0
    %210 = vmatprep.subr.mxu0 0.0
    %211 = vmatpush1.msra.mxu0 0.0
    %212 = vmatprep.subr.mxu0 0.0
    %213 = vmatpush1.msra.mxu0 0.0
    %214 = vmatprep.subr.mxu0 0.0
    %215 = vmatpush1.msra.mxu0 0.0
    %216 = vmatprep.subr.mxu0 0.0
    %217 = vmatpush1.msra.mxu0 0.0
    %218 = vmatprep.subr.mxu0 0.0
    %219 = vmatpush1.msra.mxu0 0.0
    %220 = vmatprep.mubr.f32.mxu0 0.0
    %221 = vmatmul.mubr.f32.gmra.mrb[0].mxu0 %v129
    %v222 = vpop.f32.mrb[0].mxu0
    %v223 = vadd.f32 %v154, %v222
    %v224 = vpop.f32.mrb[0].mxu0
    %225 = vmatprep.mubr.f32.mxu0 0.0
    %226 = vmatmul.mubr.f32.gmra.mrb[0].mxu0 %v130
    %v227 = vpop.f32.mrb[0].mxu0
    %v228 = vadd.f32 %v154, %v227
    %v229 = vpop.f32.mrb[0].mxu0
    %230 = vdwg.mxu0
    %v231 = vmax.f32 %v223, 0.0
    %v232 = vmax.f32 %v228, 0.0
    %s233 = scalar_lea.vmem [#allocation2], 256
    %v234 = vld [vmem:[%s233] sm:$0xff]
    %v235 = vld [vmem:[%s233 + $0x8] sm:$0xff]
    %v236 = vld [vmem:[%s233 + $0x10] sm:$0xff]
    %v237 = vld [vmem:[%s233 + $0x18] sm:$0xff]
    %v238 = vld [vmem:[%s233 + $0x20] sm:$0xff]
    %v239 = vld [vmem:[%s233 + $0x28] sm:$0xff]
    %v240 = vld [vmem:[%s233 + $0x30] sm:$0xff]
    %v241 = vld [vmem:[%s233 + $0x38] sm:$0xff]
    %v242 = vld [vmem:[%s233 + $0x40] sm:$0xff]
    %v243 = vld [vmem:[%s233 + $0x48] sm:$0xff]
    %v244 = vld [vmem:[%s233 + $0x50] sm:$0xff]
    %v245 = vld [vmem:[%s233 + $0x58] sm:$0xff]
    %v246 = vld [vmem:[%s233 + $0x60] sm:$0xff]
    %v247 = vld [vmem:[%s233 + $0x68] sm:$0xff]
    %v248 = vld [vmem:[%s233 + $0x70] sm:$0xff]
    %v249 = vld [vmem:[%s233 + $0x78] sm:$0xff]
    %s250 = scalar_lea.vmem %s2, 2
    %v251 = vld [vmem:[%s250] sm:$0x1]
    %v253 = vlaneseq
    %v254 = vshrl.u32 %v253, 7
    %v255 = vsub.s32 0, %v254
    %v256 = vrot.slane %v251, %v255
    %258 = vmatprep.subr.mxu0 0.0
    %259 = vmatpush1.msra.mxu0 %v234
    %260 = vmatprep.subr.mxu0 0.0
    %261 = vmatpush1.msra.mxu0 %v235
    %262 = vmatprep.subr.mxu0 0.0
    %263 = vmatpush1.msra.mxu0 %v236
    %264 = vmatprep.subr.mxu0 0.0
    %265 = vmatpush1.msra.mxu0 %v237
    %266 = vmatprep.subr.mxu0 0.0
    %267 = vmatpush1.msra.mxu0 %v238
    %268 = vmatprep.subr.mxu0 0.0
    %269 = vmatpush1.msra.mxu0 %v239
    %270 = vmatprep.subr.mxu0 0.0
    %271 = vmatpush1.msra.mxu0 %v240
    %272 = vmatprep.subr.mxu0 0.0
    %273 = vmatpush1.msra.mxu0 %v241
    %274 = vmatprep.subr.mxu0 0.0
    %275 = vmatpush1.msra.mxu0 %v242
    %276 = vmatprep.subr.mxu0 0.0
    %277 = vmatpush1.msra.mxu0 %v243
    %278 = vmatprep.subr.mxu0 0.0
    %279 = vmatpush1.msra.mxu0 %v244
    %280 = vmatprep.subr.mxu0 0.0
    %281 = vmatpush1.msra.mxu0 %v245
    %282 = vmatprep.subr.mxu0 0.0
    %283 = vmatpush1.msra.mxu0 %v246
    %284 = vmatprep.subr.mxu0 0.0
    %285 = vmatpush1.msra.mxu0 %v247
    %286 = vmatprep.subr.mxu0 0.0
    %287 = vmatpush1.msra.mxu0 %v248
    %288 = vmatprep.subr.mxu0 0.0
    %289 = vmatpush1.msra.mxu0 %v249
    %290 = vmatprep.subr.mxu0 0.0
    %291 = vmatpush1.msra.mxu0 0.0
    %292 = vmatprep.subr.mxu0 0.0
    %293 = vmatpush1.msra.mxu0 0.0
    %294 = vmatprep.subr.mxu0 0.0
    %295 = vmatpush1.msra.mxu0 0.0
    %296 = vmatprep.subr.mxu0 0.0
    %297 = vmatpush1.msra.mxu0 0.0
    %298 = vmatprep.subr.mxu0 0.0
    %299 = vmatpush1.msra.mxu0 0.0
    %300 = vmatprep.subr.mxu0 0.0
    %301 = vmatpush1.msra.mxu0 0.0
    %302 = vmatprep.subr.mxu0 0.0
    %303 = vmatpush1.msra.mxu0 0.0
    %304 = vmatprep.subr.mxu0 0.0
    %305 = vmatpush1.msra.mxu0 0.0
    %306 = vmatprep.subr.mxu0 0.0
    %307 = vmatpush1.msra.mxu0 0.0
    %308 = vmatprep.subr.mxu0 0.0
    %309 = vmatpush1.msra.mxu0 0.0
    %310 = vmatprep.subr.mxu0 0.0
    %311 = vmatpush1.msra.mxu0 0.0
    %312 = vmatprep.subr.mxu0 0.0
    %313 = vmatpush1.msra.mxu0 0.0
    %314 = vmatprep.subr.mxu0 0.0
    %315 = vmatpush1.msra.mxu0 0.0
    %316 = vmatprep.subr.mxu0 0.0
    %317 = vmatpush1.msra.mxu0 0.0
    %318 = vmatprep.subr.mxu0 0.0
    %319 = vmatpush1.msra.mxu0 0.0
    %320 = vmatprep.subr.mxu0 0.0
    %321 = vmatpush1.msra.mxu0 0.0
    %322 = vmatprep.mubr.f32.mxu0 0.0
    %323 = vmatmul.mubr.f32.gmra.mrb[0].mxu0 %v231
    %v324 = vpop.f32.mrb[0].mxu0
    %v325 = vadd.f32 %v256, %v324
    %v326 = vpop.f32.mrb[0].mxu0
    %327 = vmatprep.mubr.f32.mxu0 0.0
    %328 = vmatmul.mubr.f32.gmra.mrb[0].mxu0 %v232
    %v329 = vpop.f32.mrb[0].mxu0
    %v330 = vadd.f32 %v256, %v329
    %v331 = vpop.f32.mrb[0].mxu0
    %332 = vdwg.mxu0
    %s333 = scalar_lea.vmem [#allocation2], 384
    %v334 = vld [vmem:[%s333] sm:$0xff]
    %v335 = vld [vmem:[%s333 + $0x8] sm:$0xff]
    %v336 = vld [vmem:[%s333 + $0x10] sm:$0xff]
    %v337 = vld [vmem:[%s333 + $0x18] sm:$0xff]
    %v338 = vld [vmem:[%s333 + $0x20] sm:$0xff]
    %v339 = vld [vmem:[%s333 + $0x28] sm:$0xff]
    %v340 = vld [vmem:[%s333 + $0x30] sm:$0xff]
    %v341 = vld [vmem:[%s333 + $0x38] sm:$0xff]
    %v342 = vld [vmem:[%s333 + $0x40] sm:$0xff]
    %v343 = vld [vmem:[%s333 + $0x48] sm:$0xff]
    %v344 = vld [vmem:[%s333 + $0x50] sm:$0xff]
    %v345 = vld [vmem:[%s333 + $0x58] sm:$0xff]
    %v346 = vld [vmem:[%s333 + $0x60] sm:$0xff]
    %v347 = vld [vmem:[%s333 + $0x68] sm:$0xff]
    %v348 = vld [vmem:[%s333 + $0x70] sm:$0xff]
    %v349 = vld [vmem:[%s333 + $0x78] sm:$0xff]
    %s350 = scalar_lea.vmem %s2, 3
    %v351 = vld [vmem:[%s350] sm:$0x1]
    %v353 = vlaneseq
    %v354 = vshrl.u32 %v353, 7
    %v355 = vsub.s32 0, %v354
    %v356 = vrot.slane %v351, %v355
    %358 = vmatprep.subr.mxu0 0.0
    %359 = vmatpush1.msra.mxu0 %v334
    %360 = vmatprep.subr.mxu0 0.0
    %361 = vmatpush1.msra.mxu0 %v335
    %362 = vmatprep.subr.mxu0 0.0
    %363 = vmatpush1.msra.mxu0 %v336
    %364 = vmatprep.subr.mxu0 0.0
    %365 = vmatpush1.msra.mxu0 %v337
    %366 = vmatprep.subr.mxu0 0.0
    %367 = vmatpush1.msra.mxu0 %v338
    %368 = vmatprep.subr.mxu0 0.0
    %369 = vmatpush1.msra.mxu0 %v339
    %370 = vmatprep.subr.mxu0 0.0
    %371 = vmatpush1.msra.mxu0 %v340
    %372 = vmatprep.subr.mxu0 0.0
    %373 = vmatpush1.msra.mxu0 %v341
    %374 = vmatprep.subr.mxu0 0.0
    %375 = vmatpush1.msra.mxu0 %v342
    %376 = vmatprep.subr.mxu0 0.0
    %377 = vmatpush1.msra.mxu0 %v343
    %378 = vmatprep.subr.mxu0 0.0
    %379 = vmatpush1.msra.mxu0 %v344
    %380 = vmatprep.subr.mxu0 0.0
    %381 = vmatpush1.msra.mxu0 %v345
    %382 = vmatprep.subr.mxu0 0.0
    %383 = vmatpush1.msra.mxu0 %v346
    %384 = vmatprep.subr.mxu0 0.0
    %385 = vmatpush1.msra.mxu0 %v347
    %386 = vmatprep.subr.mxu0 0.0
    %387 = vmatpush1.msra.mxu0 %v348
    %388 = vmatprep.subr.mxu0 0.0
    %389 = vmatpush1.msra.mxu0 %v349
    %390 = vmatprep.subr.mxu0 0.0
    %391 = vmatpush1.msra.mxu0 0.0
    %392 = vmatprep.subr.mxu0 0.0
    %393 = vmatpush1.msra.mxu0 0.0
    %394 = vmatprep.subr.mxu0 0.0
    %395 = vmatpush1.msra.mxu0 0.0
    %396 = vmatprep.subr.mxu0 0.0
    %397 = vmatpush1.msra.mxu0 0.0
    %398 = vmatprep.subr.mxu0 0.0
    %399 = vmatpush1.msra.mxu0 0.0
    %400 = vmatprep.subr.mxu0 0.0
    %401 = vmatpush1.msra.mxu0 0.0
    %402 = vmatprep.subr.mxu0 0.0
    %403 = vmatpush1.msra.mxu0 0.0
    %404 = vmatprep.subr.mxu0 0.0
    %405 = vmatpush1.msra.mxu0 0.0
    %406 = vmatprep.subr.mxu0 0.0
    %407 = vmatpush1.msra.mxu0 0.0
    %408 = vmatprep.subr.mxu0 0.0
    %409 = vmatpush1.msra.mxu0 0.0
    %410 = vmatprep.subr.mxu0 0.0
    %411 = vmatpush1.msra.mxu0 0.0
    %412 = vmatprep.subr.mxu0 0.0
    %413 = vmatpush1.msra.mxu0 0.0
    %414 = vmatprep.subr.mxu0 0.0
    %415 = vmatpush1.msra.mxu0 0.0
    %416 = vmatprep.subr.mxu0 0.0
    %417 = vmatpush1.msra.mxu0 0.0
    %418 = vmatprep.subr.mxu0 0.0
    %419 = vmatpush1.msra.mxu0 0.0
    %420 = vmatprep.subr.mxu0 0.0
    %421 = vmatpush1.msra.mxu0 0.0
    %422 = vmatprep.mubr.f32.mxu0 0.0
    %423 = vmatmul.mubr.f32.gmra.mrb[0].mxu0 %v325
    %v424 = vpop.f32.mrb[0].mxu0
    %v425 = vadd.f32 %v356, %v424
    %v426 = vpop.f32.mrb[0].mxu0
    %427 = vmatprep.mubr.f32.mxu0 0.0
    %428 = vmatmul.mubr.f32.gmra.mrb[0].mxu0 %v330
    %v429 = vpop.f32.mrb[0].mxu0
    %v430 = vadd.f32 %v356, %v429
    %v431 = vpop.f32.mrb[0].mxu0
    %432 = vdwg.mxu0
    %v433 = vmax.f32 %v425, 0.0
    %v434 = vmax.f32 %v430, 0.0
    %s435 = scalar_lea.vmem [#allocation2], 512
    %v436 = vld [vmem:[%s435] sm:$0xff]
    %v437 = vld [vmem:[%s435 + $0x8] sm:$0xff]
    %v438 = vld [vmem:[%s435 + $0x10] sm:$0xff]
    %v439 = vld [vmem:[%s435 + $0x18] sm:$0xff]
    %v440 = vld [vmem:[%s435 + $0x20] sm:$0xff]
    %v441 = vld [vmem:[%s435 + $0x28] sm:$0xff]
    %v442 = vld [vmem:[%s435 + $0x30] sm:$0xff]
    %v443 = vld [vmem:[%s435 + $0x38] sm:$0xff]
    %v444 = vld [vmem:[%s435 + $0x40] sm:$0xff]
    %v445 = vld [vmem:[%s435 + $0x48] sm:$0xff]
    %v446 = vld [vmem:[%s435 + $0x50] sm:$0xff]
    %v447 = vld [vmem:[%s435 + $0x58] sm:$0xff]
    %v448 = vld [vmem:[%s435 + $0x60] sm:$0xff]
    %v449 = vld [vmem:[%s435 + $0x68] sm:$0xff]
    %v450 = vld [vmem:[%s435 + $0x70] sm:$0xff]
    %v451 = vld [vmem:[%s435 + $0x78] sm:$0xff]
    %s452 = scalar_lea.vmem %s2, 4
    %v453 = vld [vmem:[%s452] sm:$0x1]
    %v455 = vlaneseq
    %v456 = vshrl.u32 %v455, 7
    %v457 = vsub.s32 0, %v456
    %v458 = vrot.slane %v453, %v457
    %460 = vmatprep.subr.mxu0 0.0
    %461 = vmatpush1.msra.mxu0 %v436
    %462 = vmatprep.subr.mxu0 0.0
    %463 = vmatpush1.msra.mxu0 %v437
    %464 = vmatprep.subr.mxu0 0.0
    %465 = vmatpush1.msra.mxu0 %v438
    %466 = vmatprep.subr.mxu0 0.0
    %467 = vmatpush1.msra.mxu0 %v439
    %468 = vmatprep.subr.mxu0 0.0
    %469 = vmatpush1.msra.mxu0 %v440
    %470 = vmatprep.subr.mxu0 0.0
    %471 = vmatpush1.msra.mxu0 %v441
    %472 = vmatprep.subr.mxu0 0.0
    %473 = vmatpush1.msra.mxu0 %v442
    %474 = vmatprep.subr.mxu0 0.0
    %475 = vmatpush1.msra.mxu0 %v443
    %476 = vmatprep.subr.mxu0 0.0
    %477 = vmatpush1.msra.mxu0 %v444
    %478 = vmatprep.subr.mxu0 0.0
    %479 = vmatpush1.msra.mxu0 %v445
    %480 = vmatprep.subr.mxu0 0.0
    %481 = vmatpush1.msra.mxu0 %v446
    %482 = vmatprep.subr.mxu0 0.0
    %483 = vmatpush1.msra.mxu0 %v447
    %484 = vmatprep.subr.mxu0 0.0
    %485 = vmatpush1.msra.mxu0 %v448
    %486 = vmatprep.subr.mxu0 0.0
    %487 = vmatpush1.msra.mxu0 %v449
    %488 = vmatprep.subr.mxu0 0.0
    %489 = vmatpush1.msra.mxu0 %v450
    %490 = vmatprep.subr.mxu0 0.0
    %491 = vmatpush1.msra.mxu0 %v451
    %492 = vmatprep.subr.mxu0 0.0
    %493 = vmatpush1.msra.mxu0 0.0
    %494 = vmatprep.subr.mxu0 0.0
    %495 = vmatpush1.msra.mxu0 0.0
    %496 = vmatprep.subr.mxu0 0.0
    %497 = vmatpush1.msra.mxu0 0.0
    %498 = vmatprep.subr.mxu0 0.0
    %499 = vmatpush1.msra.mxu0 0.0
    %500 = vmatprep.subr.mxu0 0.0
    %501 = vmatpush1.msra.mxu0 0.0
    %502 = vmatprep.subr.mxu0 0.0
    %503 = vmatpush1.msra.mxu0 0.0
    %504 = vmatprep.subr.mxu0 0.0
    %505 = vmatpush1.msra.mxu0 0.0
    %506 = vmatprep.subr.mxu0 0.0
    %507 = vmatpush1.msra.mxu0 0.0
    %508 = vmatprep.subr.mxu0 0.0
    %509 = vmatpush1.msra.mxu0 0.0
    %510 = vmatprep.subr.mxu0 0.0
    %511 = vmatpush1.msra.mxu0 0.0
    %512 = vmatprep.subr.mxu0 0.0
    %513 = vmatpush1.msra.mxu0 0.0
    %514 = vmatprep.subr.mxu0 0.0
    %515 = vmatpush1.msra.mxu0 0.0
    %516 = vmatprep.subr.mxu0 0.0
    %517 = vmatpush1.msra.mxu0 0.0
    %518 = vmatprep.subr.mxu0 0.0
    %519 = vmatpush1.msra.mxu0 0.0
    %520 = vmatprep.subr.mxu0 0.0
    %521 = vmatpush1.msra.mxu0 0.0
    %522 = vmatprep.subr.mxu0 0.0
    %523 = vmatpush1.msra.mxu0 0.0
    %524 = vmatprep.mubr.f32.mxu0 0.0
    %525 = vmatmul.mubr.f32.gmra.mrb[0].mxu0 %v433
    %v526 = vpop.f32.mrb[0].mxu0
    %v527 = vadd.f32 %v458, %v526
    %v528 = vpop.f32.mrb[0].mxu0
    %529 = vmatprep.mubr.f32.mxu0 0.0
    %530 = vmatmul.mubr.f32.gmra.mrb[0].mxu0 %v434
    %v531 = vpop.f32.mrb[0].mxu0
    %v532 = vadd.f32 %v458, %v531
    %v533 = vpop.f32.mrb[0].mxu0
    %534 = vdwg.mxu0
    %v535 = vmax.f32 %v527, 0.0
    %v536 = vmax.f32 %v532, 0.0
    %s537 = scalar_lea.vmem [#allocation2], 640
    %v538 = vld [vmem:[%s537] sm:$0xff]
    %v539 = vld [vmem:[%s537 + $0x8] sm:$0xff]
    %v540 = vld [vmem:[%s537 + $0x10] sm:$0xff]
    %v541 = vld [vmem:[%s537 + $0x18] sm:$0xff]
    %v542 = vld [vmem:[%s537 + $0x20] sm:$0xff]
    %v543 = vld [vmem:[%s537 + $0x28] sm:$0xff]
    %v544 = vld [vmem:[%s537 + $0x30] sm:$0xff]
    %v545 = vld [vmem:[%s537 + $0x38] sm:$0xff]
    %v546 = vld [vmem:[%s537 + $0x40] sm:$0xff]
    %v547 = vld [vmem:[%s537 + $0x48] sm:$0xff]
    %v548 = vld [vmem:[%s537 + $0x50] sm:$0xff]
    %v549 = vld [vmem:[%s537 + $0x58] sm:$0xff]
    %v550 = vld [vmem:[%s537 + $0x60] sm:$0xff]
    %v551 = vld [vmem:[%s537 + $0x68] sm:$0xff]
    %v552 = vld [vmem:[%s537 + $0x70] sm:$0xff]
    %v553 = vld [vmem:[%s537 + $0x78] sm:$0xff]
    %s554 = scalar_lea.vmem %s2, 5
    %v555 = vld [vmem:[%s554] sm:$0x1]
    %v557 = vlaneseq
    %v558 = vshrl.u32 %v557, 7
    %v559 = vsub.s32 0, %v558
    %v560 = vrot.slane %v555, %v559
    %562 = vmatprep.subr.mxu0 0.0
    %563 = vmatpush1.msra.mxu0 %v538
    %564 = vmatprep.subr.mxu0 0.0
    %565 = vmatpush1.msra.mxu0 %v539
    %566 = vmatprep.subr.mxu0 0.0
    %567 = vmatpush1.msra.mxu0 %v540
    %568 = vmatprep.subr.mxu0 0.0
    %569 = vmatpush1.msra.mxu0 %v541
    %570 = vmatprep.subr.mxu0 0.0
    %571 = vmatpush1.msra.mxu0 %v542
    %572 = vmatprep.subr.mxu0 0.0
    %573 = vmatpush1.msra.mxu0 %v543
    %574 = vmatprep.subr.mxu0 0.0
    %575 = vmatpush1.msra.mxu0 %v544
    %576 = vmatprep.subr.mxu0 0.0
    %577 = vmatpush1.msra.mxu0 %v545
    %578 = vmatprep.subr.mxu0 0.0
    %579 = vmatpush1.msra.mxu0 %v546
    %580 = vmatprep.subr.mxu0 0.0
    %581 = vmatpush1.msra.mxu0 %v547
    %582 = vmatprep.subr.mxu0 0.0
    %583 = vmatpush1.msra.mxu0 %v548
    %584 = vmatprep.subr.mxu0 0.0
    %585 = vmatpush1.msra.mxu0 %v549
    %586 = vmatprep.subr.mxu0 0.0
    %587 = vmatpush1.msra.mxu0 %v550
    %588 = vmatprep.subr.mxu0 0.0
    %589 = vmatpush1.msra.mxu0 %v551
    %590 = vmatprep.subr.mxu0 0.0
    %591 = vmatpush1.msra.mxu0 %v552
    %592 = vmatprep.subr.mxu0 0.0
    %593 = vmatpush1.msra.mxu0 %v553
    %594 = vmatprep.subr.mxu0 0.0
    %595 = vmatpush1.msra.mxu0 0.0
    %596 = vmatprep.subr.mxu0 0.0
    %597 = vmatpush1.msra.mxu0 0.0
    %598 = vmatprep.subr.mxu0 0.0
    %599 = vmatpush1.msra.mxu0 0.0
    %600 = vmatprep.subr.mxu0 0.0
    %601 = vmatpush1.msra.mxu0 0.0
    %602 = vmatprep.subr.mxu0 0.0
    %603 = vmatpush1.msra.mxu0 0.0
    %604 = vmatprep.subr.mxu0 0.0
    %605 = vmatpush1.msra.mxu0 0.0
    %606 = vmatprep.subr.mxu0 0.0
    %607 = vmatpush1.msra.mxu0 0.0
    %608 = vmatprep.subr.mxu0 0.0
    %609 = vmatpush1.msra.mxu0 0.0
    %610 = vmatprep.subr.mxu0 0.0
    %611 = vmatpush1.msra.mxu0 0.0
    %612 = vmatprep.subr.mxu0 0.0
    %613 = vmatpush1.msra.mxu0 0.0
    %614 = vmatprep.subr.mxu0 0.0
    %615 = vmatpush1.msra.mxu0 0.0
    %616 = vmatprep.subr.mxu0 0.0
    %617 = vmatpush1.msra.mxu0 0.0
    %618 = vmatprep.subr.mxu0 0.0
    %619 = vmatpush1.msra.mxu0 0.0
    %620 = vmatprep.subr.mxu0 0.0
    %621 = vmatpush1.msra.mxu0 0.0
    %622 = vmatprep.subr.mxu0 0.0
    %623 = vmatpush1.msra.mxu0 0.0
    %624 = vmatprep.subr.mxu0 0.0
    %625 = vmatpush1.msra.mxu0 0.0
    %626 = vmatprep.mubr.f32.mxu0 0.0
    %627 = vmatmul.mubr.f32.gmra.mrb[0].mxu0 %v535
    %v628 = vpop.f32.mrb[0].mxu0
    %v629 = vadd.f32 %v560, %v628
    %v630 = vpop.f32.mrb[0].mxu0
    %631 = vmatprep.mubr.f32.mxu0 0.0
    %632 = vmatmul.mubr.f32.gmra.mrb[0].mxu0 %v536
    %v633 = vpop.f32.mrb[0].mxu0
    %v634 = vadd.f32 %v560, %v633
    %v635 = vpop.f32.mrb[0].mxu0
    %636 = vdwg.mxu0
    %637 = vst [vmem:[#allocation5] sm:$0xff] %v629
    %638 = vst [vmem:[#allocation5 + $0x8] sm:$0xff] %v634
    // Predicated region
    $region18: #{autoencoder_forward.1} parent=1 // pred_check
      _
    $region19: #{autoencoder_forward.1} parent=1 // pred_check_branch
      %640 = sbr.rel (0) target = $region21
    $region20: #{autoencoder_forward.1} parent=1 // pred_region
      %s642 = ssub.s32 256, 256
      %643 = vsyncadd [#allocation4], %s642
      %s644 = sshll.u32 [#allocation5], 4
      %s645 = int_to_ptr.vmem [resolvable:$true] %s644
      %650 = dma.vmem_to_hbm [thread:$0]  %s645, 256, %s3, [#allocation4], 128, 128, 8
    $region21: #{autoencoder_forward.1} parent=1 // pred_fallthru
      _
    // Predicated region
    $region22: #{autoencoder_forward.1} parent=1 // pred_check
      _
    $region23: #{autoencoder_forward.1} parent=1 // pred_check_branch
      %652 = sbr.rel (0) target = $region25
    $region24: #{autoencoder_forward.1} parent=1 // pred_region
      %653 = dma.done [#allocation4], 256
    $region25: #{autoencoder_forward.1} parent=1 // pred_fallthru
      _
    %654 = vsyncpa [#allocation3], 1
    %655 = vsyncpa [#allocation4], 1

</llo_original>
